<compile_context>
chip_gen: v7x
topology: tpu7x:2x2x1
jax: 0.10.0
libtpu: 0.0.40
codegen_flags: <defaults>
</compile_context>

<pallas_src>
import functools
import math

import jax
import jax.numpy as jnp
from jax.experimental import pallas as pl
from jax.experimental.pallas import tpu as pltpu


def _adacos_kernel(logits_ref, tgt_ref, cos_ref, texp_ref, loss_ref,
                   exp_acc, row_max, row_min, s_scr, rmo, se_acc,
                   *, s0, batch):
    p = pl.program_id(0)              # 0: statistics pass, 1: cross-entropy pass
    c = pl.program_id(1)              # class-tile index
    nct = pl.num_programs(1)

    x = logits_ref[...].astype(jnp.float32)                       # (B, TC)

    # ---- pass 0: global sum(exp(s0*x)) and per-row max/min of x -------------
    @pl.when(jnp.logical_and(p == 0, c == 0))
    def _init_stats():
        exp_acc[...] = jnp.zeros_like(exp_acc)
        row_max[...] = jnp.full_like(row_max, -jnp.inf)
        row_min[...] = jnp.full_like(row_min, jnp.inf)

    @pl.when(p == 0)
    def _stats():
        e = jnp.exp(s0 * x)                                        # EUP
        exp_acc[...] += jnp.sum(jnp.sum(e, axis=1, keepdims=True),
                                axis=0, keepdims=True)
        row_max[...] = jnp.maximum(row_max[...],
                                   jnp.max(x, axis=1, keepdims=True))
        row_min[...] = jnp.minimum(row_min[...],
                                   jnp.min(x, axis=1, keepdims=True))

    # ---- pass 1, first tile: AdaCos scale + softmax init ---------------------
    @pl.when(jnp.logical_and(p == 1, c == 0))
    def _scale():
        # B_avg = (sum_all exp(s0*x) - sum_target exp(s0*x)) / B
        b_avg = (exp_acc[...] - texp_ref[...]) * (1.0 / batch)     # (1, 1)
        s_new = jnp.log(b_avg) / cos_ref[...]                      # (1, 1)
        s_scr[...] = s_new
        # true per-row max of out = s_new * x (sign-aware)
        rmo[...] = jnp.where(s_new >= 0.0,
                             s_new * row_max[...],
                             s_new * row_min[...])                 # (B, 1)
        se_acc[...] = jnp.zeros_like(se_acc)

    # ---- pass 1: accumulate the per-row softmax denominator ------------------
    @pl.when(p == 1)
    def _ce():
        out = s_scr[...] * x                                       # (B, TC)
        se_acc[...] += jnp.sum(jnp.exp(out - rmo[...]),            # EUP
                               axis=1, keepdims=True)

    # ---- pass 1, last tile: mean cross-entropy --------------------------------
    @pl.when(jnp.logical_and(p == 1, c == nct - 1))
    def _finalize():
        tgt_out = s_scr[...] * tgt_ref[...].astype(jnp.float32)    # (B, 1)
        per_row = rmo[...] + jnp.log(se_acc[...]) - tgt_out        # (B, 1)
        loss_ref[...] = jnp.sum(per_row, axis=0, keepdims=True) * (1.0 / batch)


def _pick_class_tile(num_classes):
    """Lane-dense class tiles (multiples of 128) once C is big enough to matter."""
    if num_classes % 128 != 0 or num_classes <= 2048:
        # TODO(synk): class counts not divisible by 128 fall back to a single
        # full-width block; pad C in the caller for very large unaligned C.
        return num_classes
    for tc in (2048, 1536, 1024, 512, 256, 128):
        if num_classes % tc == 0:
            return tc
    return num_classes


def adacos_loss(logits, labels):
    """logits: (B, C) cosine similarities (f32 or bf16); labels: (B,) int."""
    B, C = logits.shape
    s0 = math.sqrt(2.0) * math.log(C - 1.0)     # initial AdaCos scale (self.s)
    labels_i32 = labels.astype(jnp.int32)

    # --- tiny O(B) glue in plain JAX: target gather, lower median, exp sum ----
    tgt = logits[jnp.arange(B), labels_i32]                        # (B,)
    tgt_f32 = tgt.astype(jnp.float32)
    theta_t = jnp.arccos(jnp.clip(tgt_f32, -1.0 + 1e-07, 1.0 - 1e-07))
    theta_med = jnp.sort(theta_t)[(B - 1) // 2]                    # torch lower median
    cos_term = jnp.cos(jnp.minimum(jnp.pi / 4.0, theta_med)).reshape(1, 1)
    tgt_exp_sum = jnp.sum(jnp.exp(s0 * tgt_f32)).reshape(1, 1)
    tgt_col = tgt.reshape(B, 1)

    tc = _pick_class_tile(C)
    nct = C // tc
    grid = (2, nct)                                               # (pass, class tile)

    kernel = functools.partial(_adacos_kernel, s0=s0, batch=B)
    itemsize = jnp.dtype(logits.dtype).itemsize

    # TODO(synk): b_avg couples all batch rows, so a "parallel" batch grid axis
    # (v7x megacore) would need a cross-core combine of the pass-0 sums; not
    # implemented here.
    loss = pl.pallas_call(
        kernel,
        grid=grid,
        in_specs=[
            pl.BlockSpec((B, tc), lambda p, c: (0, c)),            # logits tile
            pl.BlockSpec((B, 1), lambda p, c: (0, 0)),             # target logits
            pl.BlockSpec((1, 1), lambda p, c: (0, 0)),             # cos_term
            pl.BlockSpec((1, 1), lambda p, c: (0, 0)),             # sum exp(s0*tgt)
        ],
        out_specs=pl.BlockSpec((1, 1), lambda p, c: (0, 0)),
        out_shape=jax.ShapeDtypeStruct((1, 1), jnp.float32),
        scratch_shapes=[
            pltpu.VMEM((1, 1), jnp.float32),   # exp_acc
            pltpu.VMEM((B, 1), jnp.float32),   # row_max of x
            pltpu.VMEM((B, 1), jnp.float32),   # row_min of x
            pltpu.VMEM((1, 1), jnp.float32),   # s_new
            pltpu.VMEM((B, 1), jnp.float32),   # row max of s_new*x
            pltpu.VMEM((B, 1), jnp.float32),   # per-row sum exp accumulator
        ],
        compiler_params=pltpu.CompilerParams(
            dimension_semantics=("arbitrary", "arbitrary"),
            vmem_limit_bytes=32 * 1024 * 1024,
        ),
        cost_estimate=pl.CostEstimate(
            flops=6 * B * C,
            transcendentals=2 * B * C,
            bytes_accessed=2 * B * C * itemsize,
        ),
    )(logits, tgt_col, cos_term, tgt_exp_sum)
    return loss[0, 0]


def adacos_loss_ref(logits, labels):
    """Pure-JAX reference mirroring the PyTorch module (single forward call)."""
    B, C = logits.shape
    s0 = math.sqrt(2.0) * math.log(C - 1.0)
    lg = logits.astype(jnp.float32)
    xc = jnp.clip(lg, -1.0 + 1e-07, 1.0 - 1e-07)
    theta = jnp.arccos(xc)
    one_hot = jax.nn.one_hot(labels, C, dtype=jnp.float32)
    b_avg = jnp.sum(jnp.where(one_hot < 1, jnp.exp(s0 * lg), 0.0)) / B
    theta_t = theta[jnp.arange(B), labels]
    theta_med = jnp.sort(theta_t)[(B - 1) // 2]          # torch.median = lower median
    s = jnp.log(b_avg) / jnp.cos(jnp.minimum(jnp.pi / 4.0, theta_med))
    out = s * lg
    logp = jax.nn.log_softmax(out, axis=1)
    return -jnp.mean(logp[jnp.arange(B), labels])


if __name__ == "__main__":
    # TODO(synk): the PyTorch module mutates self.s across calls; here s is
    # recomputed per forward call (single-call semantics), matching one
    # forward() invocation.
    B, C = 8, 16  # batch, num_classes
    key = jax.random.PRNGKey(0)
    k1, k2 = jax.random.split(key)
    logits = jax.random.uniform(k1, (B, C), jnp.float32, minval=-1.0, maxval=1.0)
    labels = jax.random.randint(k2, (B,), 0, C, dtype=jnp.int32)

    loss = jax.jit(adacos_loss)(logits, labels)
    loss = jax.block_until_ready(loss)

    ref = adacos_loss_ref(logits, labels)
    assert jnp.allclose(loss, ref, rtol=1e-4, atol=1e-5), (float(loss), float(ref))
    print("KERNEL_OK")
</pallas_src>

<mosaic_0001>
module attributes {stable_mosaic.version = 11 : i64} {
  func.func @_adacos_kernel(%arg0: i32, %arg1: i32, %arg2: memref<8x16xf32, #tpu.memory_space<vmem>>, %arg3: memref<8x1xf32, #tpu.memory_space<vmem>>, %arg4: memref<1x1xf32, #tpu.memory_space<vmem>>, %arg5: memref<1x1xf32, #tpu.memory_space<vmem>>, %arg6: memref<1x1xf32, #tpu.memory_space<vmem>>, %arg7: memref<1x1xf32, #tpu.memory_space<vmem>>, %arg8: memref<8x1xf32, #tpu.memory_space<vmem>>, %arg9: memref<8x1xf32, #tpu.memory_space<vmem>>, %arg10: memref<1x1xf32, #tpu.memory_space<vmem>>, %arg11: memref<8x1xf32, #tpu.memory_space<vmem>>, %arg12: memref<8x1xf32, #tpu.memory_space<vmem>>) attributes {dimension_semantics = [#tpu.dimension_semantics<arbitrary>, #tpu.dimension_semantics<arbitrary>], iteration_bounds = array<i64: 2, 1>, scalar_prefetch = 0 : i64, scratch_operands = 6 : i64, tpu.core_type = #tpu.core_type<tc>, window_params = [{transform_indices = @transform_0, window_bounds = array<i64: 8, 16>}, {pipeline_mode = #tpu.pipeline_mode<synchronous>, transform_indices = @transform_1, window_bounds = array<i64: 8, 1>}, {pipeline_mode = #tpu.pipeline_mode<synchronous>, transform_indices = @transform_2, window_bounds = array<i64: 1, 1>}, {pipeline_mode = #tpu.pipeline_mode<synchronous>, transform_indices = @transform_3, window_bounds = array<i64: 1, 1>}, {pipeline_mode = #tpu.pipeline_mode<synchronous>, transform_indices = @transform_4, window_bounds = array<i64: 1, 1>}]} {
    %c0 = arith.constant 0 : index
    %c0_0 = arith.constant 0 : index
    %0 = vector.load %arg2[%c0, %c0_0] : memref<8x16xf32, #tpu.memory_space<vmem>>, vector<8x16xf32>
    %c0_i32 = arith.constant 0 : i32
    %1 = arith.cmpi eq, %arg0, %c0_i32 : i32
    %c0_i32_1 = arith.constant 0 : i32
    %2 = arith.cmpi eq, %arg1, %c0_i32_1 : i32
    %3 = arith.andi %1, %2 : i1
    %4 = arith.extui %3 : i1 to i32
    %c0_i32_2 = arith.constant 0 : i32
    %5 = arith.cmpi ne, %4, %c0_i32_2 : i32
    scf.if %5 {
      %cst = arith.constant 0.000000e+00 : f32
      %22 = vector.broadcast %cst : f32 to vector<1x1xf32>
      %c0_12 = arith.constant 0 : index
      %c0_13 = arith.constant 0 : index
      %23 = vector.load %arg7[%c0_12, %c0_13] : memref<1x1xf32, #tpu.memory_space<vmem>>, vector<1x1xf32>
      tpu.vector_store %arg7[%c0_12, %c0_13], %22 {strides = array<i32>} : memref<1x1xf32, #tpu.memory_space<vmem>>, vector<1x1xf32>,
      %cst_14 = arith.constant 0xFF800000 : f32
      %24 = vector.broadcast %cst_14 : f32 to vector<8x1xf32>
      %c0_15 = arith.constant 0 : index
      %c0_16 = arith.constant 0 : index
      %25 = vector.load %arg8[%c0_15, %c0_16] : memref<8x1xf32, #tpu.memory_space<vmem>>, vector<8x1xf32>
      tpu.vector_store %arg8[%c0_15, %c0_16], %24 {strides = array<i32>} : memref<8x1xf32, #tpu.memory_space<vmem>>, vector<8x1xf32>,
      %cst_17 = arith.constant 0x7F800000 : f32
      %26 = vector.broadcast %cst_17 : f32 to vector<8x1xf32>
      %c0_18 = arith.constant 0 : index
      %c0_19 = arith.constant 0 : index
      %27 = vector.load %arg9[%c0_18, %c0_19] : memref<8x1xf32, #tpu.memory_space<vmem>>, vector<8x1xf32>
      tpu.vector_store %arg9[%c0_18, %c0_19], %26 {strides = array<i32>} : memref<8x1xf32, #tpu.memory_space<vmem>>, vector<8x1xf32>,
    } else {
    }
    %c0_i32_3 = arith.constant 0 : i32
    %6 = arith.cmpi eq, %arg0, %c0_i32_3 : i32
    %7 = arith.extui %6 : i1 to i32
    %c0_i32_4 = arith.constant 0 : i32
    %8 = arith.cmpi ne, %7, %c0_i32_4 : i32
    scf.if %8 {
      %cst = arith.constant 3.82976127 : f32
      %22 = vector.broadcast %cst : f32 to vector<8x16xf32>
      %23 = arith.mulf %22, %0 : vector<8x16xf32>
      %24 = math.exp %23 : vector<8x16xf32>
      %c0_12 = arith.constant 0 : index
      %c0_13 = arith.constant 0 : index
      %25 = vector.load %arg7[%c0_12, %c0_13] : memref<1x1xf32, #tpu.memory_space<vmem>>, vector<1x1xf32>
      %cst_14 = arith.constant dense<0.000000e+00> : vector<8xf32>
      %26 = vector.multi_reduction <add>, %24, %cst_14 [1] : vector<8x16xf32> to vector<8xf32>
      %27 = vector.shape_cast %26 : vector<8xf32> to vector<8x1xf32>
      %cst_15 = arith.constant dense<0.000000e+00> : vector<1xf32>
      %28 = vector.multi_reduction <add>, %27, %cst_15 [0] : vector<8x1xf32> to vector<1xf32>
      %29 = vector.shape_cast %28 : vector<1xf32> to vector<1x1xf32>
      %30 = arith.addf %25, %29 : vector<1x1xf32>
      %c0_16 = arith.constant 0 : index
      %c0_17 = arith.constant 0 : index
      %31 = vector.load %arg7[%c0_16, %c0_17] : memref<1x1xf32, #tpu.memory_space<vmem>>, vector<1x1xf32>
      tpu.vector_store %arg7[%c0_16, %c0_17], %30 {strides = array<i32>} : memref<1x1xf32, #tpu.memory_space<vmem>>, vector<1x1xf32>,
      %c0_18 = arith.constant 0 : index
      %c0_19 = arith.constant 0 : index
      %32 = vector.load %arg8[%c0_18, %c0_19] : memref<8x1xf32, #tpu.memory_space<vmem>>, vector<8x1xf32>
      %cst_20 = arith.constant dense<0xFF800000> : vector<8xf32>
      %33 = vector.multi_reduction <maximumf>, %0, %cst_20 [1] : vector<8x16xf32> to vector<8xf32>
      %34 = vector.shape_cast %33 : vector<8xf32> to vector<8x1xf32>
      %35 = arith.maximumf %32, %34 : vector<8x1xf32>
      %c0_21 = arith.constant 0 : index
      %c0_22 = arith.constant 0 : index
      %36 = vector.load %arg8[%c0_21, %c0_22] : memref<8x1xf32, #tpu.memory_space<vmem>>, vector<8x1xf32>
      tpu.vector_store %arg8[%c0_21, %c0_22], %35 {strides = array<i32>} : memref<8x1xf32, #tpu.memory_space<vmem>>, vector<8x1xf32>,
      %c0_23 = arith.constant 0 : index
      %c0_24 = arith.constant 0 : index
      %37 = vector.load %arg9[%c0_23, %c0_24] : memref<8x1xf32, #tpu.memory_space<vmem>>, vector<8x1xf32>
      %cst_25 = arith.constant dense<0x7F800000> : vector<8xf32>
      %38 = vector.multi_reduction <minimumf>, %0, %cst_25 [1] : vector<8x16xf32> to vector<8xf32>
      %39 = vector.shape_cast %38 : vector<8xf32> to vector<8x1xf32>
      %40 = arith.minimumf %37, %39 : vector<8x1xf32>
      %c0_26 = arith.constant 0 : index
      %c0_27 = arith.constant 0 : index
      %41 = vector.load %arg9[%c0_26, %c0_27] : memref<8x1xf32, #tpu.memory_space<vmem>>, vector<8x1xf32>
      tpu.vector_store %arg9[%c0_26, %c0_27], %40 {strides = array<i32>} : memref<8x1xf32, #tpu.memory_space<vmem>>, vector<8x1xf32>,
    } else {
    }
    %c1_i32 = arith.constant 1 : i32
    %9 = arith.cmpi eq, %arg0, %c1_i32 : i32
    %c0_i32_5 = arith.constant 0 : i32
    %10 = arith.cmpi eq, %arg1, %c0_i32_5 : i32
    %11 = arith.andi %9, %10 : i1
    %12 = arith.extui %11 : i1 to i32
    %c0_i32_6 = arith.constant 0 : i32
    %13 = arith.cmpi ne, %12, %c0_i32_6 : i32
    scf.if %13 {
      %c0_12 = arith.constant 0 : index
      %c0_13 = arith.constant 0 : index
      %22 = vector.load %arg7[%c0_12, %c0_13] : memref<1x1xf32, #tpu.memory_space<vmem>>, vector<1x1xf32>
      %c0_14 = arith.constant 0 : index
      %c0_15 = arith.constant 0 : index
      %23 = vector.load %arg5[%c0_14, %c0_15] : memref<1x1xf32, #tpu.memory_space<vmem>>, vector<1x1xf32>
      %24 = arith.subf %22, %23 : vector<1x1xf32>
      %cst = arith.constant 1.250000e-01 : f32
      %25 = vector.broadcast %cst : f32 to vector<1x1xf32>
      %26 = arith.mulf %24, %25 : vector<1x1xf32>
      %27 = math.log %26 : vector<1x1xf32>
      %c0_16 = arith.constant 0 : index
      %c0_17 = arith.constant 0 : index
      %28 = vector.load %arg4[%c0_16, %c0_17] : memref<1x1xf32, #tpu.memory_space<vmem>>, vector<1x1xf32>
      %29 = arith.divf %27, %28 : vector<1x1xf32>
      %c0_18 = arith.constant 0 : index
      %c0_19 = arith.constant 0 : index
      %30 = vector.load %arg10[%c0_18, %c0_19] : memref<1x1xf32, #tpu.memory_space<vmem>>, vector<1x1xf32>
      tpu.vector_store %arg10[%c0_18, %c0_19], %29 {strides = array<i32>} : memref<1x1xf32, #tpu.memory_space<vmem>>, vector<1x1xf32>,
      %cst_20 = arith.constant 0.000000e+00 : f32
      %31 = vector.broadcast %cst_20 : f32 to vector<1x1xf32>
      %32 = arith.cmpf oge, %29, %31 : vector<1x1xf32>
      %c0_21 = arith.constant 0 : index
      %c0_22 = arith.constant 0 : index
      %33 = vector.load %arg8[%c0_21, %c0_22] : memref<8x1xf32, #tpu.memory_space<vmem>>, vector<8x1xf32>
      %34 = vector.broadcast %29 : vector<1x1xf32> to vector<8x1xf32>
      %35 = arith.mulf %34, %33 : vector<8x1xf32>
      %c0_23 = arith.constant 0 : index
      %c0_24 = arith.constant 0 : index
      %36 = vector.load %arg9[%c0_23, %c0_24] : memref<8x1xf32, #tpu.memory_space<vmem>>, vector<8x1xf32>
      %37 = vector.broadcast %29 : vector<1x1xf32> to vector<8x1xf32>
      %38 = arith.mulf %37, %36 : vector<8x1xf32>
      %39 = vector.shape_cast %32 : vector<1x1xi1> to vector<1x1xi1>
      %40 = vector.broadcast %39 : vector<1x1xi1> to vector<8x1xi1>
      %41 = arith.select %40, %35, %38 : vector<8x1xi1>, vector<8x1xf32>
      %c0_25 = arith.constant 0 : index
      %c0_26 = arith.constant 0 : index
      %42 = vector.load %arg11[%c0_25, %c0_26] : memref<8x1xf32, #tpu.memory_space<vmem>>, vector<8x1xf32>
      tpu.vector_store %arg11[%c0_25, %c0_26], %41 {strides = array<i32>} : memref<8x1xf32, #tpu.memory_space<vmem>>, vector<8x1xf32>,
      %cst_27 = arith.constant 0.000000e+00 : f32
      %43 = vector.broadcast %cst_27 : f32 to vector<8x1xf32>
      %c0_28 = arith.constant 0 : index
      %c0_29 = arith.constant 0 : index
      %44 = vector.load %arg12[%c0_28, %c0_29] : memref<8x1xf32, #tpu.memory_space<vmem>>, vector<8x1xf32>
      tpu.vector_store %arg12[%c0_28, %c0_29], %43 {strides = array<i32>} : memref<8x1xf32, #tpu.memory_space<vmem>>, vector<8x1xf32>,
    } else {
    }
    %c1_i32_7 = arith.constant 1 : i32
    %14 = arith.cmpi eq, %arg0, %c1_i32_7 : i32
    %15 = arith.extui %14 : i1 to i32
    %c0_i32_8 = arith.constant 0 : i32
    %16 = arith.cmpi ne, %15, %c0_i32_8 : i32
    scf.if %16 {
      %c0_12 = arith.constant 0 : index
      %c0_13 = arith.constant 0 : index
      %22 = vector.load %arg10[%c0_12, %c0_13] : memref<1x1xf32, #tpu.memory_space<vmem>>, vector<1x1xf32>
      %23 = vector.broadcast %22 : vector<1x1xf32> to vector<8x16xf32>
      %24 = arith.mulf %23, %0 : vector<8x16xf32>
      %c0_14 = arith.constant 0 : index
      %c0_15 = arith.constant 0 : index
      %25 = vector.load %arg12[%c0_14, %c0_15] : memref<8x1xf32, #tpu.memory_space<vmem>>, vector<8x1xf32>
      %c0_16 = arith.constant 0 : index
      %c0_17 = arith.constant 0 : index
      %26 = vector.load %arg11[%c0_16, %c0_17] : memref<8x1xf32, #tpu.memory_space<vmem>>, vector<8x1xf32>
      %27 = vector.broadcast %26 : vector<8x1xf32> to vector<8x16xf32>
      %28 = arith.subf %24, %27 : vector<8x16xf32>
      %29 = math.exp %28 : vector<8x16xf32>
      %cst = arith.constant dense<0.000000e+00> : vector<8xf32>
      %30 = vector.multi_reduction <add>, %29, %cst [1] : vector<8x16xf32> to vector<8xf32>
      %31 = vector.shape_cast %30 : vector<8xf32> to vector<8x1xf32>
      %32 = arith.addf %25, %31 : vector<8x1xf32>
      %c0_18 = arith.constant 0 : index
      %c0_19 = arith.constant 0 : index
      %33 = vector.load %arg12[%c0_18, %c0_19] : memref<8x1xf32, #tpu.memory_space<vmem>>, vector<8x1xf32>
      tpu.vector_store %arg12[%c0_18, %c0_19], %32 {strides = array<i32>} : memref<8x1xf32, #tpu.memory_space<vmem>>, vector<8x1xf32>,
    } else {
    }
    %c1_i32_9 = arith.constant 1 : i32
    %17 = arith.cmpi eq, %arg0, %c1_i32_9 : i32
    %c0_i32_10 = arith.constant 0 : i32
    %18 = arith.cmpi eq, %arg1, %c0_i32_10 : i32
    %19 = arith.andi %17, %18 : i1
    %20 = arith.extui %19 : i1 to i32
    %c0_i32_11 = arith.constant 0 : i32
    %21 = arith.cmpi ne, %20, %c0_i32_11 : i32
    scf.if %21 {
      %c0_12 = arith.constant 0 : index
      %c0_13 = arith.constant 0 : index
      %22 = vector.load %arg10[%c0_12, %c0_13] : memref<1x1xf32, #tpu.memory_space<vmem>>, vector<1x1xf32>
      %c0_14 = arith.constant 0 : index
      %c0_15 = arith.constant 0 : index
      %23 = vector.load %arg3[%c0_14, %c0_15] : memref<8x1xf32, #tpu.memory_space<vmem>>, vector<8x1xf32>
      %24 = vector.broadcast %22 : vector<1x1xf32> to vector<8x1xf32>
      %25 = arith.mulf %24, %23 : vector<8x1xf32>
      %c0_16 = arith.constant 0 : index
      %c0_17 = arith.constant 0 : index
      %26 = vector.load %arg11[%c0_16, %c0_17] : memref<8x1xf32, #tpu.memory_space<vmem>>, vector<8x1xf32>
      %c0_18 = arith.constant 0 : index
      %c0_19 = arith.constant 0 : index
      %27 = vector.load %arg12[%c0_18, %c0_19] : memref<8x1xf32, #tpu.memory_space<vmem>>, vector<8x1xf32>
      %28 = math.log %27 : vector<8x1xf32>
      %29 = arith.addf %26, %28 : vector<8x1xf32>
      %30 = arith.subf %29, %25 : vector<8x1xf32>
      %cst = arith.constant dense<0.000000e+00> : vector<1xf32>
      %31 = vector.multi_reduction <add>, %30, %cst [0] : vector<8x1xf32> to vector<1xf32>
      %32 = vector.shape_cast %31 : vector<1xf32> to vector<1x1xf32>
      %cst_20 = arith.constant 1.250000e-01 : f32
      %33 = vector.broadcast %cst_20 : f32 to vector<1x1xf32>
      %34 = arith.mulf %32, %33 : vector<1x1xf32>
      %c0_21 = arith.constant 0 : index
      %c0_22 = arith.constant 0 : index
      %35 = vector.load %arg6[%c0_21, %c0_22] : memref<1x1xf32, #tpu.memory_space<vmem>>, vector<1x1xf32>
      tpu.vector_store %arg6[%c0_21, %c0_22], %34 {strides = array<i32>} : memref<1x1xf32, #tpu.memory_space<vmem>>, vector<1x1xf32>,
    } else {
    }
    return
  }
  func.func @transform_0(%arg0: i32, %arg1: i32) -> (i32, i32) {
    %c0_i32 = arith.constant 0 : i32
    %c0_i32_0 = arith.constant 0 : i32
    return %c0_i32, %arg1 : i32, i32
  }
  func.func @transform_1(%arg0: i32, %arg1: i32) -> (i32, i32) {
    %c0_i32 = arith.constant 0 : i32
    %c0_i32_0 = arith.constant 0 : i32
    %c0_i32_1 = arith.constant 0 : i32
    return %c0_i32, %c0_i32_0 : i32, i32
  }
  func.func @transform_2(%arg0: i32, %arg1: i32) -> (i32, i32) {
    %c0_i32 = arith.constant 0 : i32
    %c0_i32_0 = arith.constant 0 : i32
    %c0_i32_1 = arith.constant 0 : i32
    return %c0_i32, %c0_i32_0 : i32, i32
  }
  func.func @transform_3(%arg0: i32, %arg1: i32) -> (i32, i32) {
    %c0_i32 = arith.constant 0 : i32
    %c0_i32_0 = arith.constant 0 : i32
    %c0_i32_1 = arith.constant 0 : i32
    return %c0_i32, %c0_i32_0 : i32, i32
  }
  func.func @transform_4(%arg0: i32, %arg1: i32) -> (i32, i32) {
    %c0_i32 = arith.constant 0 : i32
    %c0_i32_0 = arith.constant 0 : i32
    %c0_i32_1 = arith.constant 0 : i32
    return %c0_i32, %c0_i32_0 : i32, i32
  }
}

</mosaic_0001>

<llo_original>
// kernel: adacos_loss.1
$region0: #{adacos_loss.1}
  #allocation0 [shape = 'u32[]', space=smem, size = 0x4, offset = 0x4, fixed_abs, tag = 'smem constant byte address 0x4 - core index']
  #allocation1 [shape = 'u32[144,128]{1,0:T(1,128)}', space=vmem, size = 0x12000, scoped, tag = 'internal scratch']
  #allocation2 [shape = 'f32[1,1]{1,0:T(1,128)}', space=vmem, size = 0x200, scoped, tag = 'scratch operand']
  #allocation3 [shape = 'f32[8,1]{1,0:T(8,128)}', space=vmem, size = 0x1000, scoped, tag = 'scratch operand']
  #allocation4 [shape = 'f32[8,1]{1,0:T(8,128)}', space=vmem, size = 0x1000, scoped, tag = 'scratch operand']
  #allocation5 [shape = 'f32[1,1]{1,0:T(1,128)}', space=vmem, size = 0x200, scoped, tag = 'scratch operand']
  #allocation6 [shape = 'f32[8,1]{1,0:T(8,128)}', space=vmem, size = 0x1000, scoped, tag = 'scratch operand']
  #allocation7 [shape = 'f32[8,1]{1,0:T(8,128)}', space=vmem, size = 0x1000, scoped, tag = 'scratch operand']
  #allocation8 [shape = 'f32[1,1]{1,0:T(1,128)S(1)}', space=vmem, size = 0x200, scoped, tag = 'scoped memory for adacos_loss.1']
  #allocation9 [shape = 'f32[1,1]{1,0:T(1,128)S(1)}', space=vmem, size = 0x200, scoped, tag = 'scoped memory for adacos_loss.1']
  %s0 = inlined_call_operand.vmem [shape: f32[8,16], index: 0, kind: input, shape index: {}]
  %s1 = inlined_call_operand.vmem [shape: f32[8,1], index: 1, kind: input, shape index: {}]
  %s2 = inlined_call_operand.<no memory space> [shape: f32[1,1], index: 2, kind: input, shape index: {}]
  %s3 = inlined_call_operand.<no memory space> [shape: f32[1,1], index: 3, kind: input, shape index: {}]
  %s4 = inlined_call_operand.hbm [shape: f32[1,1], index: 4, kind: output, shape index: {}]
  %s5 = sld [smem:[#allocation0]]
  $region69: #{adacos_loss.1} parent=0
    _
  %s7 = ssub.s32 1, %s5
  %s8 = scalar_select 0, %s7, %s5
  %v9 = vstv %s2
  %10 = vst [vmem:[#allocation8] sm:$0x1] %v9
  %v11 = vstv %s3
  %12 = vst [vmem:[#allocation9] sm:$0x1] %v11
  $region1: #{adacos_loss.1} parent=0
    #allocation10 [shape = 'u8[512]{0}', space=vmem, size = 0x400, scoped, tag = 'output window, operand 0, single buffered']
    #allocation11 [shape = 's32[2]{0}', space=sflag, size = 0x8, scoped, tag = 'scoped memory for adacos_loss.1']
    %13 = vsyncpa [#allocation11], 0
    loop: start=0, step=1, limit=4
    $region2: #{adacos_loss.1} parent=1 // loop_pre_header
      _
    $region3: #{adacos_loss.1} parent=1 // loop_header
      %s15 = sphi 0, %s19
      %p16 = scmp.ge.s32.totalorder %s15, 4
      %s22 = sphi 0, %s34
      %s23 = sphi 0, %s30
      %s24 = sphi 0, %s22
      %s25 = sphi 0, %s23
      %s26 = sphi 0, %s24
      %s27 = sphi 0, %s25
      %s37 = sphi 0, %s39
      %s40 = sphi 0, %s37
      %s41 = sphi 0, %s40
      %s57 = sphi 0, %s41
      %s61 = sphi 0, %s61
      %s63 = sphi 0, %s61
      %s64 = sphi 0, %s63
      %s78 = sphi 0, %s64
      %s82 = sphi 0, %s82
      %s84 = sphi 0, %s82
      %s85 = sphi 0, %s84
      %s99 = sphi 0, %s85
      %s103 = sphi 0, %s103
      %s105 = sphi 0, %s103
      %s106 = sphi 0, %s105
      %s120 = sphi 0, %s106
      %s124 = sphi 0, %s124
      %s126 = sphi 0, %s124
      %s127 = sphi 0, %s126
      %s141 = sphi 0, %s127
    $region4: #{adacos_loss.1} parent=1 // loop_header_branch
      %18 = sbr.rel (%p16) target = $region8
    $region5: #{adacos_loss.1} parent=1 // loop_body
      %s20 = ssub.s32 %s15, 1
      %s21 = ssub.s32 %s15, 2
      %s28 = sadd.s32 1, %s23
      %p29 = scmp.ge.s32.totalorder %s28, 1
      %s30 = scalar_select %p29, 0, %s28
      %s31 = sadd.s32 1, %s22
      %s32 = scalar_select %p29, %s31, %s22
      %p33 = scmp.ge.s32.totalorder %s32, 2
      %s34 = scalar_select %p33, 0, %s32
      %s35 = ssub.s32 %s23, %s30
      %p36 = scmp.eq.s32.totalorder %s35, 0
      %s38 = sadd.s32 %s37, 1
      %s39 = scalar_select %p36, %s37, %s38
      %p42 = pneg %p36
      %p43 = scmp.eq.s32.totalorder %s15, 1
      %p44 = por %p42, %p43
      %p45 = scmp.ne.s32.totalorder %s37, %s40
      %p46 = scmp.eq.s32.totalorder %s15, 0
      %p47 = por %p45, %p46
      %p48 = scmp.ne.s32.totalorder %s37, %s40
      %p49 = scmp.eq.s32.totalorder %s20, 1
      %p50 = por %p48, %p49
      %p51 = scmp.ne.s32.totalorder %s40, %s41
      %p52 = scmp.eq.s32.totalorder %s20, 0
      %p53 = por %p51, %p52
      %p54 = scmp.ne.s32.totalorder %s40, %s41
      %p55 = scmp.eq.s32.totalorder %s21, 1
      %p56 = por %p54, %p55
      %p58 = scmp.ne.s32.totalorder %s41, %s57
      %p59 = scmp.eq.s32.totalorder %s21, 0
      %p60 = por %p58, %p59
      %s62 = sadd.s32 %s61, 1
      %p65 = scmp.eq.s32.totalorder %s15, 1
      %p66 = scmp.ne.s32.totalorder %s61, %s63
      %p67 = scmp.eq.s32.totalorder %s15, 0
      %p68 = por %p66, %p67
      %p69 = scmp.ne.s32.totalorder %s61, %s63
      %p70 = scmp.eq.s32.totalorder %s20, 1
      %p71 = por %p69, %p70
      %p72 = scmp.ne.s32.totalorder %s63, %s64
      %p73 = scmp.eq.s32.totalorder %s20, 0
      %p74 = por %p72, %p73
      %p75 = scmp.ne.s32.totalorder %s63, %s64
      %p76 = scmp.eq.s32.totalorder %s21, 1
      %p77 = por %p75, %p76
      %p79 = scmp.ne.s32.totalorder %s64, %s78
      %p80 = scmp.eq.s32.totalorder %s21, 0
      %p81 = por %p79, %p80
      %s83 = sadd.s32 %s82, 1
      %p86 = scmp.eq.s32.totalorder %s15, 1
      %p87 = scmp.ne.s32.totalorder %s82, %s84
      %p88 = scmp.eq.s32.totalorder %s15, 0
      %p89 = por %p87, %p88
      %p90 = scmp.ne.s32.totalorder %s82, %s84
      %p91 = scmp.eq.s32.totalorder %s20, 1
      %p92 = por %p90, %p91
      %p93 = scmp.ne.s32.totalorder %s84, %s85
      %p94 = scmp.eq.s32.totalorder %s20, 0
      %p95 = por %p93, %p94
      %p96 = scmp.ne.s32.totalorder %s84, %s85
      %p97 = scmp.eq.s32.totalorder %s21, 1
      %p98 = por %p96, %p97
      %p100 = scmp.ne.s32.totalorder %s85, %s99
      %p101 = scmp.eq.s32.totalorder %s21, 0
      %p102 = por %p100, %p101
      %s104 = sadd.s32 %s103, 1
      %p107 = scmp.eq.s32.totalorder %s15, 1
      %p108 = scmp.ne.s32.totalorder %s103, %s105
      %p109 = scmp.eq.s32.totalorder %s15, 0
      %p110 = por %p108, %p109
      %p111 = scmp.ne.s32.totalorder %s103, %s105
      %p112 = scmp.eq.s32.totalorder %s20, 1
      %p113 = por %p111, %p112
      %p114 = scmp.ne.s32.totalorder %s105, %s106
      %p115 = scmp.eq.s32.totalorder %s20, 0
      %p116 = por %p114, %p115
      %p117 = scmp.ne.s32.totalorder %s105, %s106
      %p118 = scmp.eq.s32.totalorder %s21, 1
      %p119 = por %p117, %p118
      %p121 = scmp.ne.s32.totalorder %s106, %s120
      %p122 = scmp.eq.s32.totalorder %s21, 0
      %p123 = por %p121, %p122
      %s125 = sadd.s32 %s124, 1
      %p128 = scmp.eq.s32.totalorder %s15, 1
      %p129 = scmp.ne.s32.totalorder %s124, %s126
      %p130 = scmp.eq.s32.totalorder %s15, 0
      %p131 = por %p129, %p130
      %p132 = scmp.ne.s32.totalorder %s124, %s126
      %p133 = scmp.eq.s32.totalorder %s20, 1
      %p134 = por %p132, %p133
      %p135 = scmp.ne.s32.totalorder %s126, %s127
      %p136 = scmp.eq.s32.totalorder %s20, 0
      %p137 = por %p135, %p136
      %p138 = scmp.ne.s32.totalorder %s126, %s127
      %p139 = scmp.eq.s32.totalorder %s21, 1
      %p140 = por %p138, %p139
      %p142 = scmp.ne.s32.totalorder %s127, %s141
      %p143 = scmp.eq.s32.totalorder %s21, 0
      %p144 = por %p142, %p143
      %p145 = scmp.le.s32.totalorder 1, %s15
      %p146 = scmp.lt.s32.totalorder %s15, 3
      %p147 = pnand %p145, %p146
      %p148 = pneg %p147
      // Predicated region
      $region9: #{adacos_loss.1} parent=5 // pred_check
        _
      $region10: #{adacos_loss.1} parent=5 // pred_check_branch
        %150 = sbr.rel (%p147) target = $region12
      $region11: #{adacos_loss.1} parent=5 // pred_region
        %s151 = ssub.s32 %s15, 1
        // Predicated region
        $region13: #{adacos_loss.1} parent=11 // pred_check
          %p152 = pneg %p53
        $region14: #{adacos_loss.1} parent=11 // pred_check_branch
          %154 = sbr.rel (%p152) target = $region16
        $region15: #{adacos_loss.1} parent=11 // pred_region
          %p155 = scmp.lt.s32.totalorder %s25, 0
          %s156 = scalar_select %p155, %s25, 0
          %s157 = smul.addr %s156, 8
          %s158 = scalar_lea.vmem %s0, %s157
        $region16: #{adacos_loss.1} parent=11 // pred_fallthru
          _
        // Predicated region
        $region17: #{adacos_loss.1} parent=11 // pred_check
          %p159 = pneg %p74
        $region18: #{adacos_loss.1} parent=11 // pred_check_branch
          %161 = sbr.rel (%p159) target = $region20
        $region19: #{adacos_loss.1} parent=11 // pred_region
          _
        $region20: #{adacos_loss.1} parent=11 // pred_fallthru
          _
        // Predicated region
        $region21: #{adacos_loss.1} parent=11 // pred_check
          %p162 = pneg %p95
        $region22: #{adacos_loss.1} parent=11 // pred_check_branch
          %164 = sbr.rel (%p162) target = $region24
        $region23: #{adacos_loss.1} parent=11 // pred_region
          _
        $region24: #{adacos_loss.1} parent=11 // pred_fallthru
          _
        // Predicated region
        $region25: #{adacos_loss.1} parent=11 // pred_check
          %p165 = pneg %p116
        $region26: #{adacos_loss.1} parent=11 // pred_check_branch
          %167 = sbr.rel (%p165) target = $region28
        $region27: #{adacos_loss.1} parent=11 // pred_region
          _
        $region28: #{adacos_loss.1} parent=11 // pred_fallthru
          _
      $region12: #{adacos_loss.1} parent=5 // pred_fallthru
        _
      %p168 = scmp.lt.s32.totalorder %s15, 2
      // Predicated region
      $region29: #{adacos_loss.1} parent=5 // pred_check
        %p169 = pneg %p168
      $region30: #{adacos_loss.1} parent=5 // pred_check_branch
        %171 = sbr.rel (%p169) target = $region32
      $region31: #{adacos_loss.1} parent=5 // pred_region
        _
      $region32: #{adacos_loss.1} parent=5 // pred_fallthru
        _
      %p172 = scmp.le.s32.totalorder 1, %s15
      %p173 = scmp.lt.s32.totalorder %s15, 3
      %p174 = pnand %p172, %p173
      %p175 = pneg %p174
      // Predicated region
      $region33: #{adacos_loss.1} parent=5 // pred_check
        _
      $region34: #{adacos_loss.1} parent=5 // pred_check_branch
        %177 = sbr.rel (%p174) target = $region36
      $region35: #{adacos_loss.1} parent=5 // pred_region
        %s178 = ssub.s32 %s15, 1
        %p179 = scmp.lt.s32.totalorder %s25, 0
        %s180 = scalar_select %p179, %s25, 0
        %s181 = smul.addr %s180, 8
        %s182 = scalar_lea.vmem %s0, %s181
        %p183 = pneg %p53
        %p184 = pneg %p50
        %p185 = pneg %p74
        %p186 = pneg %p71
        %p187 = pneg %p95
        %p188 = pneg %p92
        %p189 = pneg %p116
        %p190 = pneg %p113
        %p191 = pneg %p137
        %p192 = pneg %p134
        %p193 = scmp.lt.s32.totalorder %s25, 0
        %s194 = scalar_select %p193, %s25, 0
        %s195 = smul.addr %s194, 8
        %s196 = scalar_lea.vmem %s0, %s195
        %v197 = vld [vmem:[%s196] sm:$0xff]
        %p198 = scmp.eq.s32.totalorder %s24, 0
        %p199 = scmp.eq.s32.totalorder %s25, 0
        %p200 = pnand %p198, %p199
        %p201 = pneg %p200
        // Predicated region
        $region37: #{adacos_loss.1} parent=35 // pred_check
          _
        $region38: #{adacos_loss.1} parent=35 // pred_check_branch
          %203 = sbr.rel (%p200) target = $region40
        $region39: #{adacos_loss.1} parent=35 // pred_region
          %vm204 = vcmask 0
          %205 = vst.msk [vmem:[#allocation2] sm:$0x1] %vm204, 0.0
          %vm206 = vcmask 7168
          %207 = vst.msk [vmem:[#allocation3] sm:$0xff] %vm206, -inf
          %208 = vst.msk [vmem:[#allocation4] sm:$0xff] %vm206, inf
        $region40: #{adacos_loss.1} parent=35 // pred_fallthru
          _
        // Predicated region
        $region41: #{adacos_loss.1} parent=35 // pred_check
          %p209 = pneg %p198
        $region42: #{adacos_loss.1} parent=35 // pred_check_branch
          %211 = sbr.rel (%p209) target = $region44
        $region43: #{adacos_loss.1} parent=35 // pred_region
          %v212 = vmul.f32 %v197, 3.8297613
          %v213 = vmul.f32 %v212, 1.442695
          %v214 = vpow.pop %v213
          %v215 = vld [vmem:[#allocation2] sm:$0x1]
          %vm216 = vcmask 130048
          %v217 = vsel %vm216, %v214, 0.0
          %218 = vadd.xlane.f32.xlu0 %v217
          %v219 = vpop.xlane.xlu0 %218
          %v220 = vrot.slane %v219, 4
          %v221 = vadd.f32 %v219, %v220
          %v222 = vrot.slane %v221, 2
          %v223 = vadd.f32 %v221, %v222
          %v224 = vrot.slane %v223, 1
          %v225 = vadd.f32 %v223, %v224
          %v226 = vadd.f32 %v215, %v225
          %vm227 = vcmask 0
          %228 = vst.msk [vmem:[#allocation2] sm:$0x1] %vm227, %v226
          %v229 = vld [vmem:[#allocation3] sm:$0xff]
          %v230 = vsel %vm216, %v197, -inf
          %231 = vmax.xlane.f32.xlu0 %v230
          %v232 = vpop.xlane.xlu0 %231
          %v233 = vmax.f32 %v229, %v232
          %vm234 = vcmask 7168
          %235 = vst.msk [vmem:[#allocation3] sm:$0xff] %vm234, %v233
          %v236 = vld [vmem:[#allocation4] sm:$0xff]
          %v237 = vsel %vm216, %v197, inf
          %238 = vmin.xlane.f32.xlu0 %v237
          %v239 = vpop.xlane.xlu0 %238
          %v240 = vmin.f32 %v236, %v239
          %241 = vst.msk [vmem:[#allocation4] sm:$0xff] %vm234, %v240
        $region44: #{adacos_loss.1} parent=35 // pred_fallthru
          _
        %p242 = scmp.eq.s32.totalorder %s24, 1
        %p243 = pnand %p242, %p199
        %p244 = pneg %p243
        // Predicated region
        $region45: #{adacos_loss.1} parent=35 // pred_check
          _
        $region46: #{adacos_loss.1} parent=35 // pred_check_branch
          %246 = sbr.rel (%p243) target = $region48
        $region47: #{adacos_loss.1} parent=35 // pred_region
          %v247 = vld [vmem:[#allocation2] sm:$0x1]
          %v248 = vld [vmem:[#allocation9] sm:$0x1]
          %v249 = vsub.f32 %v247, %v248
          %v250 = vmul.f32 %v249, 0.125
          %v251 = vlog2.pop %v250
          %v252 = vmul.f32 %v251, 0.6931472
          %v253 = vld [vmem:[#allocation8] sm:$0x1]
          %v254 = vrcp.pop %v253
          %v255 = vmul.f32 %v252, %v254
          %vm256 = vcmask 0
          %257 = vst.msk [vmem:[#allocation5] sm:$0x1] %vm256, %v255
          %vm258 = vcmp.ge.f32.partialorder %v255, 0.0
          %v259 = vld [vmem:[#allocation3] sm:$0xff]
          %v261 = vlaneseq
          %v262 = vshrl.u32 %v261, 7
          %v263 = vsub.s32 0, %v262
          %v264 = vrot.slane %v255, %v263
          %v266 = vmul.f32 %v264, %v259
          %v267 = vld [vmem:[#allocation4] sm:$0xff]
          %v268 = vmul.f32 %v264, %v267
          %v269 = vsel %vm258, 1, 0
          %v270 = vlaneseq
          %v271 = vshrl.u32 %v270, 7
          %v272 = vsub.s32 0, %v271
          %v273 = vrot.slane %v269, %v272
          %vm274 = vcmp.eq.s32.totalorder %v273, 1
          %v275 = vsel %vm274, %v266, %v268
          %vm276 = vcmask 7168
          %277 = vst.msk [vmem:[#allocation6] sm:$0xff] %vm276, %v275
          %278 = vst.msk [vmem:[#allocation7] sm:$0xff] %vm276, 0.0
        $region48: #{adacos_loss.1} parent=35 // pred_fallthru
          _
        // Predicated region
        $region49: #{adacos_loss.1} parent=35 // pred_check
          %p279 = pneg %p242
        $region50: #{adacos_loss.1} parent=35 // pred_check_branch
          %281 = sbr.rel (%p279) target = $region52
        $region51: #{adacos_loss.1} parent=35 // pred_region
          %v282 = vld [vmem:[#allocation5] sm:$0x1]
          %v284 = vlaneseq
          %v285 = vshrl.u32 %v284, 7
          %v286 = vsub.s32 0, %v285
          %v287 = vrot.slane %v282, %v286
          %288 = vset.pattern.permute.xlu0 0
          %289 = vperm.xlu0 %288, %v287
          %v290 = vpop.permute.xlu0 %289
          %v292 = vmul.f32 %v290, %v197
          %v293 = vld [vmem:[#allocation7] sm:$0xff]
          %v294 = vld [vmem:[#allocation6] sm:$0xff]
          %296 = vset.pattern.permute.xlu0 0
          %297 = vperm.xlu0 %296, %v294
          %v298 = vpop.permute.xlu0 %297
          %v300 = vsub.f32 %v292, %v298
          %v301 = vmul.f32 %v300, 1.442695
          %v302 = vpow.pop %v301
          %vm303 = vcmask 130048
          %v304 = vsel %vm303, %v302, 0.0
          %305 = vadd.xlane.f32.xlu0 %v304
          %v306 = vpop.xlane.xlu0 %305
          %v307 = vadd.f32 %v293, %v306
          %vm308 = vcmask 7168
          %309 = vst.msk [vmem:[#allocation7] sm:$0xff] %vm308, %v307
        $region52: #{adacos_loss.1} parent=35 // pred_fallthru
          _
        // Predicated region
        $region53: #{adacos_loss.1} parent=35 // pred_check
          _
        $region54: #{adacos_loss.1} parent=35 // pred_check_branch
          %311 = sbr.rel (%p243) target = $region56
        $region55: #{adacos_loss.1} parent=35 // pred_region
          %v312 = vld [vmem:[#allocation5] sm:$0x1]
          %v313 = vld [vmem:[%s1] sm:$0xff]
          %v315 = vlaneseq
          %v316 = vshrl.u32 %v315, 7
          %v317 = vsub.s32 0, %v316
          %v318 = vrot.slane %v312, %v317
          %v320 = vmul.f32 %v318, %v313
          %v321 = vld [vmem:[#allocation6] sm:$0xff]
          %v322 = vld [vmem:[#allocation7] sm:$0xff]
          %v323 = vlog2.pop %v322
          %v324 = vmul.f32 %v323, 0.6931472
          %v325 = vadd.f32 %v321, %v324
          %v326 = vsub.f32 %v325, %v320
          %vm327 = vcmask 7168
          %v328 = vsel %vm327, %v326, 0.0
          %v329 = vrot.slane %v328, 4
          %v330 = vadd.f32 %v328, %v329
          %v331 = vrot.slane %v330, 2
          %v332 = vadd.f32 %v330, %v331
          %v333 = vrot.slane %v332, 1
          %v334 = vadd.f32 %v332, %v333
          %v335 = vmul.f32 %v334, 0.125
          %vm336 = vcmask 0
          %337 = vst.msk [vmem:[#allocation10] sm:$0x1] %vm336, %v335
        $region56: #{adacos_loss.1} parent=35 // pred_fallthru
          _
        // Predicated region
        $region57: #{adacos_loss.1} parent=35 // pred_check
          %p338 = pneg %p134
        $region58: #{adacos_loss.1} parent=35 // pred_check_branch
          %340 = sbr.rel (%p338) target = $region60
        $region59: #{adacos_loss.1} parent=35 // pred_region
          %s342 = ssub.s32 16, 16
          %343 = vsyncadd [#allocation11], %s342
          %s345 = sshll.u32 [#allocation10], 4
          %s346 = int_to_ptr.vmem [resolvable:$true] %s345
          %348 = dma.vmem_to_hbm [thread:$0]  %s346, 16, %s4, [#allocation11]
        $region60: #{adacos_loss.1} parent=35 // pred_fallthru
          _
        // Predicated region
        $region61: #{adacos_loss.1} parent=35 // pred_check
          %p349 = pneg %p134
        $region62: #{adacos_loss.1} parent=35 // pred_check_branch
          %351 = sbr.rel (%p349) target = $region64
        $region63: #{adacos_loss.1} parent=35 // pred_region
          %352 = dma.done [#allocation11], 16
        $region64: #{adacos_loss.1} parent=35 // pred_fallthru
          _
      $region36: #{adacos_loss.1} parent=5 // pred_fallthru
        _
      %p353 = scmp.le.s32.totalorder 2, %s15
      // Predicated region
      $region65: #{adacos_loss.1} parent=5 // pred_check
        %p354 = pneg %p353
      $region66: #{adacos_loss.1} parent=5 // pred_check_branch
        %356 = sbr.rel (%p354) target = $region68
      $region67: #{adacos_loss.1} parent=5 // pred_region
        %s357 = ssub.s32 %s15, 2
      $region68: #{adacos_loss.1} parent=5 // pred_fallthru
        _
    $region6: #{adacos_loss.1} parent=1 // loop_footer
      %s19 = sadd.s32 1, %s15
    $region7: #{adacos_loss.1} parent=1 // loop_footer_branch
      %14 = sbr.rel target = $region3
    $region8: #{adacos_loss.1} parent=1 // loop_exit
      _
    %358 = vsyncpa [#allocation11], 1
    %s359 = scalar_lea.sflag [#allocation11], 1
    %360 = vsyncpa %s359, 1

</llo_original>
